<compile_context>
chip_gen: v7x
topology: tpu7x:2x2x1
jax: 0.10.0
libtpu: 0.0.40
codegen_flags: <defaults>
</compile_context>

<pallas_src>
import math
import functools
import numpy as np
import jax
import jax.numpy as jnp
from jax.experimental import pallas as pl
from jax.experimental.pallas import tpu as pltpu

_INV_SQRT2 = 0.7071067811865476
_HALO_ROWS = 16          # halo block height (multiple of 16 = safe sublane tile for f32/bf16)
_LANE = 128
_EPS = 1e-5


def _gelu_exact(x):
    # exact (erf) GELU, matches torch nn.GELU() default (approximate='none')
    return 0.5 * x * (1.0 + jax.lax.erf(x * _INV_SQRT2))


def _round_up(n, m):
    return ((n + m - 1) // m) * m


def _cdiv(a, b):
    return -(-a // b)


# --------------------------------------------------------------------------- kernels


def _conv_kernel(*refs, t_tile, widths, has_halo, has_pre, post_gelu,
                 emit_stats, valid_rows, compute_dtype):
    """One time-tile of a stride-folded Conv1d as k_eff accumulated MXU matmuls.

    refs order: x, [x_halo], w, [pre_scale, pre_shift], out, [stats]
      x        (t_tile, sC)       folded input rows (sC = stride * C_in)
      x_halo   (_HALO_ROWS, sC)   rows right after the tile (only if k_eff > 1)
      w        (k_eff, sC, C_out) per-tap weights (tap rows beyond its width are zero)
      pre_*    (1, sC)            fused GroupNorm scale/shift of the previous layer
      out      (t_tile, C_out)
      stats    (8, C_out)         rows 0/1 = masked partial sum / sum of squares
    """
    i = 0
    x_ref = refs[i]; i += 1
    h_ref = None
    if has_halo:
        h_ref = refs[i]; i += 1
    w_ref = refs[i]; i += 1
    ps_ref = pb_ref = None
    if has_pre:
        ps_ref, pb_ref = refs[i], refs[i + 1]; i += 2
    o_ref = refs[i]; i += 1
    st_ref = refs[i] if emit_stats else None

    xw = x_ref[...]
    if has_halo:
        xw = jnp.concatenate([xw, h_ref[...]], axis=0)      # aligned sublane concat
    if has_pre:
        # previous layer's GroupNorm affine + GELU fused into this layer's read (f32 math)
        xw = _gelu_exact(xw.astype(jnp.float32) * ps_ref[...] + pb_ref[...])
    xw = xw.astype(compute_dtype)

    acc = None
    for j, wd in enumerate(widths):                          # unrolled; k_eff is 1 or 2
        xj = xw[j:j + t_tile, :wd]                           # trimmed contraction width
        wj = w_ref[j][:wd, :]
        p = jnp.dot(xj, wj, preferred_element_type=jnp.float32)
        acc = p if acc is None else acc + p

    if emit_stats:
        # masked per-tile partial GroupNorm stats from the f32 accumulator (pre-cast)
        row = (jax.lax.broadcasted_iota(jnp.int32, (t_tile, 1), 0)
               + pl.program_id(1) * t_tile)
        valid = row < valid_rows
        psum = jnp.sum(jnp.where(valid, acc, 0.0), axis=0, keepdims=True)
        psq = jnp.sum(jnp.where(valid, acc * acc, 0.0), axis=0, keepdims=True)
        ridx = jax.lax.broadcasted_iota(jnp.int32, st_ref.shape, 0)
        st_ref[...] = jnp.where(ridx == 0, psum, jnp.where(ridx == 1, psq, 0.0))

    if post_gelu:
        acc = _gelu_exact(acc)
    o_ref[...] = acc.astype(o_ref.dtype)


def _gn_apply_gelu_kernel(y_ref, s_ref, b_ref, o_ref):
    # Standalone GroupNorm-apply + GELU (only used when the GN layer is the last layer).
    v = y_ref[...].astype(jnp.float32) * s_ref[...] + b_ref[...]
    o_ref[...] = _gelu_exact(v).astype(o_ref.dtype)


# --------------------------------------------------------------------------- VMEM planning


def _physical_vmem_bytes():
    cap = None
    try:
        cap = int(pltpu.get_tpu_info().vmem_capacity_bytes)
    except Exception:
        cap = None
    if cap is None or not (16 * 2**20 <= cap <= 512 * 2**20):
        try:
            kind = jax.devices()[0].device_kind.lower()
        except Exception:
            kind = ""
        cap = 64 * 2**20 if ("v7" in kind or "7x" in kind) else 128 * 2**20
    return cap


def _step_bytes(t_tile, sC, c_out, k_eff, b_in, b_out, has_pre, emit_stats):
    est = 2 * t_tile * sC * b_in               # folded input block (double buffered)
    est += 2 * _HALO_ROWS * sC * b_in          # halo block
    est += 2 * k_eff * sC * c_out * b_in       # resident weights (counted double-buffered)
    est += 2 * t_tile * c_out * b_out          # output block
    if has_pre:
        est += 4 * sC * 4
    if emit_stats:
        est += 2 * 8 * c_out * 4
    # in-kernel live values: window copy, matmul staging, f32 accumulator
    est += t_tile * sC * (4 + b_in) + 2 * t_tile * c_out * 4
    return est + (2 << 20)


def _choose_t_tile(t_out_valid, sC, c_out, k_eff, b_in, b_out, has_pre, emit_stats, budget):
    cap_rows = max(16, _round_up(t_out_valid, 16))
    for cand in (1024, 512, 256, 128, 64, 32, 16):
        if cand > cap_rows:
            continue
        if _step_bytes(cand, sC, c_out, k_eff, b_in, b_out, has_pre, emit_stats) <= budget:
            return cand
    return 16


# --------------------------------------------------------------------------- layer wrappers


def _conv_layer_call(x, p, *, t_tile, n_t, t_store_out, pre, post_gelu,
                     emit_stats, valid_rows, out_dtype, compute_dtype, vmem_limit):
    """One Conv1d (+ optional fused pre-GN/GELU, post-GELU, partial GN stats)."""
    B, t_in_store, c_in = x.shape
    s, k_eff, c_out = p['s'], p['k_eff'], p['c_out_p']
    sC = s * c_in
    assert c_in == p['c_in_p']
    assert t_tile % _HALO_ROWS == 0 and t_in_store % s == 0
    r_f = t_in_store // s
    has_halo = k_eff > 1
    assert r_f >= n_t * t_tile + (_HALO_ROWS if has_halo else 0)
    assert t_store_out % t_tile == 0 and t_store_out >= n_t * t_tile

    x_f = x.reshape(B, r_f, sC)                      # stride folded, contiguous reshape only
    w = p['w_pack'].astype(compute_dtype)

    in_specs = [pl.BlockSpec((None, t_tile, sC), lambda b, t: (b, t, 0))]
    args = [x_f]
    if has_halo:
        q = t_tile // _HALO_ROWS
        in_specs.append(pl.BlockSpec((None, _HALO_ROWS, sC),
                                     lambda b, t: (b, (t + 1) * q, 0)))
        args.append(x_f)                              # same HBM buffer, small halo window
    # Resident folded weights (constant index_map -> fetched once per call).
    # TODO(synk): pipeline_mode=pl.Buffered(1) to single-buffer once verified everywhere.
    in_specs.append(pl.BlockSpec((k_eff, sC, c_out), lambda b, t: (0, 0, 0)))
    args.append(w)
    if pre is not None:
        in_specs.append(pl.BlockSpec((None, 1, sC), lambda b, t: (b, 0, 0)))
        in_specs.append(pl.BlockSpec((None, 1, sC), lambda b, t: (b, 0, 0)))
        args.extend(pre)

    y_shape = jax.ShapeDtypeStruct((B, t_store_out, c_out), out_dtype)
    y_spec = pl.BlockSpec((None, t_tile, c_out), lambda b, t: (b, t, 0))
    if emit_stats:
        out_shape = (y_shape, jax.ShapeDtypeStruct((B, n_t * 8, c_out), jnp.float32))
        out_specs = (y_spec, pl.BlockSpec((None, 8, c_out), lambda b, t: (b, t, 0)))
    else:
        out_shape, out_specs = y_shape, y_spec

    kernel = functools.partial(
        _conv_kernel, t_tile=t_tile, widths=p['widths'], has_halo=has_halo,
        has_pre=pre is not None, post_gelu=post_gelu, emit_stats=emit_stats,
        valid_rows=valid_rows, compute_dtype=compute_dtype)

    return pl.pallas_call(
        kernel,
        grid=(B, n_t),
        in_specs=in_specs,
        out_specs=out_specs,
        out_shape=out_shape,
        compiler_params=pltpu.CompilerParams(
            dimension_semantics=("parallel", "parallel"),
            vmem_limit_bytes=vmem_limit),
    )(*args)


def _gn_finalize(stats, gamma, beta, *, n_valid):
    """Tiny XLA reduction of the per-tile partial sums -> per-(batch, channel) scale/shift."""
    B, r8, C = stats.shape
    st = stats.reshape(B, r8 // 8, 8, C)
    ssum = jnp.sum(st[:, :, 0, :], axis=1)
    ssq = jnp.sum(st[:, :, 1, :], axis=1)
    mean = ssum / n_valid
    var = jnp.maximum(ssq / n_valid - mean * mean, 0.0)
    rstd = jax.lax.rsqrt(var + _EPS)
    scale = gamma[None, :] * rstd
    shift = beta[None, :] - mean * scale
    return scale, shift


def _gn_apply_gelu(y, scale, shift, *, t_tile, out_dtype, vmem_limit):
    """Standalone GN-apply + GELU (only when the GroupNorm layer is the last layer)."""
    B, t_s, C = y.shape
    assert t_s % t_tile == 0
    sc = scale.reshape(B, 1, C).astype(jnp.float32)
    sh = shift.reshape(B, 1, C).astype(jnp.float32)
    return pl.pallas_call(
        _gn_apply_gelu_kernel,
        grid=(B, t_s // t_tile),
        in_specs=[pl.BlockSpec((None, t_tile, C), lambda b, t: (b, t, 0)),
                  pl.BlockSpec((None, 1, C), lambda b, t: (b, 0, 0)),
                  pl.BlockSpec((None, 1, C), lambda b, t: (b, 0, 0))],
        out_specs=pl.BlockSpec((None, t_tile, C), lambda b, t: (b, t, 0)),
        out_shape=jax.ShapeDtypeStruct((B, t_s, C), out_dtype),
        compiler_params=pltpu.CompilerParams(
            dimension_semantics=("parallel", "parallel"),
            vmem_limit_bytes=vmem_limit),
    )(y, sc, sh)


# --------------------------------------------------------------------------- params


def init_params(key, conv_layers, first_conv=True):
    """Deterministic synthetic init matching the torch module's parameter shapes."""
    in_d = 1 if first_conv else 768
    params = []
    for (dim, k, stride) in conv_layers:
        key, wk = jax.random.split(key)
        std = math.sqrt(2.0 / (in_d * k))   # kaiming_normal_ on (C_out, C_in, k)
        w = std * jax.random.normal(wk, (dim, in_d, k), jnp.float32)
        params.append(dict(w=w, gamma=jnp.ones((dim,), jnp.float32),
                           beta=jnp.zeros((dim,), jnp.float32), k=k, stride=stride))
        in_d = dim
    return params


def pack_params(params):
    """One-time weight rearrangement: channel pad to 128 lanes + per-tap fold (trimmed)."""
    packed, prev_cout_p = [], None
    for i, p in enumerate(params):
        c_out, c_in, k = p['w'].shape
        s = p['stride']
        k_eff = _cdiv(k, s)
        assert k_eff - 1 < _HALO_ROWS, "kernel/stride combination needs a taller halo"
        c_out_p = _round_up(c_out, _LANE)                       # lane-dense output stores
        if i == 0:
            c_in_p = c_in if c_in == 1 else _round_up(c_in, _LANE)
        else:
            c_in_p = prev_cout_p
        w_pad = jnp.zeros((c_out_p, c_in_p, k), jnp.float32).at[:c_out, :c_in, :].set(p['w'])
        w_t = jnp.transpose(w_pad, (2, 1, 0))                   # (k, c_in_p, c_out_p)
        pack = jnp.zeros((k_eff, s * c_in_p, c_out_p), jnp.float32)
        widths = []
        for j in range(k_eff):
            wd = min(s, k - j * s)                              # taps trimmed to k samples
            widths.append(wd * c_in_p)
            pack = pack.at[j, :wd * c_in_p, :].set(
                w_t[j * s: j * s + wd].reshape(wd * c_in_p, c_out_p))
        gamma_p = jnp.ones((c_out_p,), jnp.float32).at[:c_out].set(p['gamma'])
        beta_p = jnp.zeros((c_out_p,), jnp.float32).at[:c_out].set(p['beta'])
        packed.append(dict(w_pack=pack, gamma_p=gamma_p, beta_p=beta_p,
                           k=k, s=s, k_eff=k_eff, widths=tuple(widths),
                           c_in_p=c_in_p, c_out=c_out, c_out_p=c_out_p))
        prev_cout_p = c_out_p
    return packed


# --------------------------------------------------------------------------- forward


def conv_feature_extraction_forward(x, packed, mode='default',
                                    compute_dtype=jnp.float32):
    """Matches ConvFeatureExtractionModel.forward for mode='default'.

    Input (B, T) or (B, C, T); output (B, C_out, T_out) in f32 (torch NCL layout).
    compute_dtype: matmul-operand / inter-layer dtype (f32 tight or bf16 perf);
                   accumulation, GroupNorm stats and GELU math stay in f32.
    """
    assert mode == 'default'
    # TODO(synk): mode='layer_norm' (per-position Fp32LayerNorm) not implemented.
    # TODO(synk): conv_bias=True variant not implemented (module default is bias-free).
    compute_dtype = np.dtype(compute_dtype)
    n_layers = len(packed)

    if x.ndim == 2:
        x = x[:, :, None]                       # (B, T) -> (B, T, 1)
    else:
        x = jnp.transpose(x, (0, 2, 1))         # (B, C, T) -> (B, T, C)
    B, T, C_in = x.shape
    cin0 = packed[0]['c_in_p']
    assert C_in <= cin0

    # -------- static planning (valid lengths, tiles, over-allocated storage lengths)
    t_valid, tlen = [], T
    for p in packed:
        tlen = (tlen - p['k']) // p['s'] + 1
        assert tlen >= 1, "input too short for this conv stack"
        t_valid.append(tlen)

    phys = _physical_vmem_bytes()
    vmem_cap = max(32 * 2**20, phys - 20 * 2**20)   # ~44 MiB on v7x, ~108 MiB on v5e/v6e
    budget = int(vmem_cap * 0.8)
    b_c = compute_dtype.itemsize

    t_tile, n_t, vmem_lim = [], [], []
    for i, p in enumerate(packed):
        sC = p['s'] * p['c_in_p']
        b_in = 4 if i == 0 else b_c
        b_out = 4 if i == n_layers - 1 else b_c
        has_pre_i, emit_stats_i = (i == 1), (i == 0)
        tt = _choose_t_tile(t_valid[i], sC, p['c_out_p'], p['k_eff'],
                            b_in, b_out, has_pre_i, emit_stats_i, budget)
        t_tile.append(tt)
        n_t.append(_cdiv(t_valid[i], tt))
        est = _step_bytes(tt, sC, p['c_out_p'], p['k_eff'], b_in, b_out,
                          has_pre_i, emit_stats_i)
        vmem_lim.append(int(min(vmem_cap, max(est * 5 // 4, 32 * 2**20))))

    rows_needed = [n_t[i] * t_tile[i] + (_HALO_ROWS if packed[i]['k_eff'] > 1 else 0)
                   for i in range(n_layers)]
    t_store = [0] * n_layers
    for i in range(n_layers - 1, -1, -1):
        if i == n_layers - 1:
            t_store[i] = _round_up(t_valid[i], t_tile[i])
        else:
            s_next = packed[i + 1]['s']
            need = max(t_valid[i], s_next * rows_needed[i + 1])
            t_store[i] = _round_up(need, math.lcm(t_tile[i], s_next))
    t_audio = max(_round_up(T, packed[0]['s']), packed[0]['s'] * rows_needed[0])

    # single zero-pad of the raw input (time tail + optional channel pad); no per-layer pads
    pad_t, pad_c = t_audio - T, cin0 - C_in
    if pad_t or pad_c:
        x = jnp.pad(x, ((0, 0), (0, pad_t), (0, pad_c)))

    # -------- layer chain
    pre = None
    for i, p in enumerate(packed):
        last = (i == n_layers - 1)
        emit_stats = (i == 0)
        out_dtype = jnp.float32 if last else compute_dtype
        outs = _conv_layer_call(
            x, p, t_tile=t_tile[i], n_t=n_t[i], t_store_out=t_store[i],
            pre=pre, post_gelu=not emit_stats, emit_stats=emit_stats,
            valid_rows=t_valid[i], out_dtype=out_dtype,
            compute_dtype=compute_dtype, vmem_limit=vmem_lim[i])
        pre = None
        if emit_stats:
            y, stats = outs
            scale, shift = _gn_finalize(stats, p['gamma_p'], p['beta_p'],
                                        n_valid=t_valid[i])
            if last:
                x = _gn_apply_gelu(y, scale, shift, t_tile=t_tile[i],
                                   out_dtype=jnp.float32, vmem_limit=vmem_lim[i])
            else:
                # fold the per-(batch, channel) affine for the NEXT layer's stride folding
                s_next = packed[i + 1]['s']
                pre = (jnp.tile(scale, (1, s_next)).reshape(scale.shape[0], 1, -1),
                       jnp.tile(shift, (1, s_next)).reshape(shift.shape[0], 1, -1))
                x = y
        else:
            x = outs
        # dropout p=0.0 -> no-op

    x = x[:, :t_valid[-1], :packed[-1]['c_out']]
    return jnp.transpose(x, (0, 2, 1)).astype(jnp.float32)   # torch NCL (B, C_out, T_out)


# --------------------------------------------------------------------------- reference


def reference_forward(x, params, mode='default'):
    """Pure-JAX reference (XLA conv) for correctness checking."""
    if x.ndim == 2:
        x = x[:, None, :]
    for i, p in enumerate(params):
        x = jax.lax.conv_general_dilated(
            x, p['w'], window_strides=(p['stride'],), padding='VALID',
            dimension_numbers=('NCH', 'OIH', 'NCH'))
        if mode == 'default' and i == 0:
            mean = jnp.mean(x, axis=-1, keepdims=True)
            var = jnp.mean((x - mean) ** 2, axis=-1, keepdims=True)
            x = (x - mean) * jax.lax.rsqrt(var + _EPS)
            x = x * p['gamma'][None, :, None] + p['beta'][None, :, None]
        x = jax.nn.gelu(x, approximate=False)
    return x


if __name__ == "__main__":
    key = jax.random.PRNGKey(0)
    kx, kp = jax.random.split(key)

    # small synthetic config: GN layer, a middle layer, and a k<=s (no-halo) layer
    conv_layers = [(32, 3, 2), (32, 3, 2), (32, 2, 2)]
    B, T = 2, 64
    x = jax.random.normal(kx, (B, T), jnp.float32)

    params = init_params(kp, conv_layers, first_conv=True)
    packed = pack_params(params)

    ref = reference_forward(x, params)                        # (2, 32, 7)

    # f32 path: tight validation
    out_f32 = jax.block_until_ready(
        conv_feature_extraction_forward(x, packed, compute_dtype=jnp.float32))
    assert out_f32.shape == ref.shape, (out_f32.shape, ref.shape)
    np.testing.assert_allclose(np.asarray(out_f32), np.asarray(ref), rtol=2e-3, atol=2e-3)

    # bf16 matmul-operand / inter-layer path (perf mode): looser validation
    out_bf16 = jax.block_until_ready(
        conv_feature_extraction_forward(x, packed, compute_dtype=jnp.bfloat16))
    np.testing.assert_allclose(np.asarray(out_bf16), np.asarray(ref), rtol=1e-1, atol=5e-2)

    print("KERNEL_OK")
</pallas_src>

<mosaic_0001>
module attributes {stable_mosaic.version = 11 : i64} {
  func.func @_conv_kernel(%arg0: i32, %arg1: i32, %arg2: memref<1x32x2xf32, #tpu.memory_space<vmem>>, %arg3: memref<1x16x2xf32, #tpu.memory_space<vmem>>, %arg4: memref<2x2x128xf32, #tpu.memory_space<vmem>>, %arg5: memref<1x32x128xf32, #tpu.memory_space<vmem>>, %arg6: memref<1x8x128xf32, #tpu.memory_space<vmem>>) attributes {dimension_semantics = [#tpu.dimension_semantics<parallel>, #tpu.dimension_semantics<parallel>], iteration_bounds = array<i64: 2, 1>, scalar_prefetch = 0 : i64, scratch_operands = 0 : i64, tpu.core_type = #tpu.core_type<tc>, window_params = [{transform_indices = @transform_0, window_bounds = array<i64: 1, 32, 2>}, {transform_indices = @transform_1, window_bounds = array<i64: 1, 16, 2>}, {pipeline_mode = #tpu.pipeline_mode<synchronous>, transform_indices = @transform_2, window_bounds = array<i64: 2, 2, 128>}, {transform_indices = @transform_3, window_bounds = array<i64: 1, 32, 128>}, {transform_indices = @transform_4, window_bounds = array<i64: 1, 8, 128>}]} {
    %c0 = arith.constant 0 : index
    %c0_0 = arith.constant 0 : index
    %c0_1 = arith.constant 0 : index
    %0 = vector.load %arg2[%c0, %c0_0, %c0_1] : memref<1x32x2xf32, #tpu.memory_space<vmem>>, vector<1x32x2xf32>
    %1 = vector.shape_cast %0 : vector<1x32x2xf32> to vector<32x2xf32>
    %c0_2 = arith.constant 0 : index
    %c0_3 = arith.constant 0 : index
    %c0_4 = arith.constant 0 : index
    %2 = vector.load %arg3[%c0_2, %c0_3, %c0_4] : memref<1x16x2xf32, #tpu.memory_space<vmem>>, vector<1x16x2xf32>
    %3 = vector.shape_cast %2 : vector<1x16x2xf32> to vector<16x2xf32>
    %4 = tpu.concatenate %1, %3 in 0 : vector<32x2xf32>, vector<16x2xf32> -> vector<48x2xf32>
    %5 = vector.extract_strided_slice %4 {offsets = [0, 0], sizes = [32, 2], strides = [1, 1]} : vector<48x2xf32> to vector<32x2xf32>
    %c0_5 = arith.constant 0 : index
    %c0_6 = arith.constant 0 : index
    %c0_7 = arith.constant 0 : index
    %6 = vector.load %arg4[%c0_5, %c0_6, %c0_7] : memref<2x2x128xf32, #tpu.memory_space<vmem>>, vector<1x2x128xf32>
    %7 = vector.shape_cast %6 : vector<1x2x128xf32> to vector<2x128xf32>
    %cst = arith.constant dense<0.000000e+00> : vector<32x128xf32>
    %8 = tpu.matmul %5, %7, %cst {dimension_numbers = #tpu.dot_dimension_numbers<[1], [0], [0], [1], [0, 0, 1, 1], [], []>} : vector<32x2xf32>, vector<2x128xf32>, vector<32x128xf32> -> vector<32x128xf32>
    %9 = vector.extract_strided_slice %4 {offsets = [1, 0], sizes = [32, 1], strides = [1, 1]} : vector<48x2xf32> to vector<32x1xf32>
    %c1 = arith.constant 1 : index
    %c0_8 = arith.constant 0 : index
    %c0_9 = arith.constant 0 : index
    %10 = vector.load %arg4[%c1, %c0_8, %c0_9] : memref<2x2x128xf32, #tpu.memory_space<vmem>>, vector<1x2x128xf32>
    %11 = vector.shape_cast %10 : vector<1x2x128xf32> to vector<2x128xf32>
    %12 = vector.extract_strided_slice %11 {offsets = [0, 0], sizes = [1, 128], strides = [1, 1]} : vector<2x128xf32> to vector<1x128xf32>
    %cst_10 = arith.constant dense<0.000000e+00> : vector<32x128xf32>
    %13 = tpu.matmul %9, %12, %cst_10 {dimension_numbers = #tpu.dot_dimension_numbers<[1], [0], [0], [1], [0, 0, 1, 1], [], []>} : vector<32x1xf32>, vector<1x128xf32>, vector<32x128xf32> -> vector<32x128xf32>
    %14 = arith.addf %8, %13 : vector<32x128xf32>
    %15 = tpu.iota {dimensions = array<i32: 0>} : vector<32x1xi32>
    %c32_i32 = arith.constant 32 : i32
    %16 = arith.muli %arg1, %c32_i32 : i32
    %17 = vector.broadcast %16 : i32 to vector<32x1xi32>
    %18 = arith.addi %15, %17 : vector<32x1xi32>
    %c31_i32 = arith.constant 31 : i32
    %19 = vector.broadcast %c31_i32 : i32 to vector<32x1xi32>
    %20 = arith.cmpi slt, %18, %19 : vector<32x1xi32>
    %cst_11 = arith.constant 0.000000e+00 : f32
    %21 = vector.shape_cast %20 : vector<32x1xi1> to vector<32x1xi1>
    %22 = vector.broadcast %21 : vector<32x1xi1> to vector<32x128xi1>
    %23 = vector.broadcast %cst_11 : f32 to vector<32x128xf32>
    %24 = arith.select %22, %14, %23 : vector<32x128xi1>, vector<32x128xf32>
    %cst_12 = arith.constant dense<0.000000e+00> : vector<128xf32>
    %25 = vector.multi_reduction <add>, %24, %cst_12 [0] : vector<32x128xf32> to vector<128xf32>
    %26 = vector.shape_cast %25 : vector<128xf32> to vector<1x128xf32>
    %27 = arith.mulf %14, %14 : vector<32x128xf32>
    %cst_13 = arith.constant 0.000000e+00 : f32
    %28 = vector.shape_cast %20 : vector<32x1xi1> to vector<32x1xi1>
    %29 = vector.broadcast %28 : vector<32x1xi1> to vector<32x128xi1>
    %30 = vector.broadcast %cst_13 : f32 to vector<32x128xf32>
    %31 = arith.select %29, %27, %30 : vector<32x128xi1>, vector<32x128xf32>
    %cst_14 = arith.constant dense<0.000000e+00> : vector<128xf32>
    %32 = vector.multi_reduction <add>, %31, %cst_14 [0] : vector<32x128xf32> to vector<128xf32>
    %33 = vector.shape_cast %32 : vector<128xf32> to vector<1x128xf32>
    %34 = tpu.iota {dimensions = array<i32: 0>} : vector<8x128xi32>
    %c0_i32 = arith.constant 0 : i32
    %35 = vector.broadcast %c0_i32 : i32 to vector<8x128xi32>
    %36 = arith.cmpi eq, %34, %35 : vector<8x128xi32>
    %c1_i32 = arith.constant 1 : i32
    %37 = vector.broadcast %c1_i32 : i32 to vector<8x128xi32>
    %38 = arith.cmpi eq, %34, %37 : vector<8x128xi32>
    %cst_15 = arith.constant 0.000000e+00 : f32
    %39 = vector.shape_cast %33 : vector<1x128xf32> to vector<1x128xf32>
    %40 = vector.broadcast %39 : vector<1x128xf32> to vector<8x128xf32>
    %41 = vector.broadcast %cst_15 : f32 to vector<8x128xf32>
    %42 = arith.select %38, %40, %41 : vector<8x128xi1>, vector<8x128xf32>
    %43 = vector.shape_cast %26 : vector<1x128xf32> to vector<1x128xf32>
    %44 = vector.broadcast %43 : vector<1x128xf32> to vector<8x128xf32>
    %45 = arith.select %36, %44, %42 : vector<8x128xi1>, vector<8x128xf32>
    %c0_16 = arith.constant 0 : index
    %c0_17 = arith.constant 0 : index
    %c0_18 = arith.constant 0 : index
    %46 = vector.load %arg6[%c0_16, %c0_17, %c0_18] : memref<1x8x128xf32, #tpu.memory_space<vmem>>, vector<1x8x128xf32>
    %47 = vector.shape_cast %46 : vector<1x8x128xf32> to vector<8x128xf32>
    %48 = vector.shape_cast %45 : vector<8x128xf32> to vector<1x8x128xf32>
    tpu.vector_store %arg6[%c0_16, %c0_17, %c0_18], %48 {strides = array<i32>} : memref<1x8x128xf32, #tpu.memory_space<vmem>>, vector<1x8x128xf32>,
    %c0_19 = arith.constant 0 : index
    %c0_20 = arith.constant 0 : index
    %c0_21 = arith.constant 0 : index
    %49 = vector.load %arg5[%c0_19, %c0_20, %c0_21] : memref<1x32x128xf32, #tpu.memory_space<vmem>>, vector<1x32x128xf32>
    %50 = vector.shape_cast %49 : vector<1x32x128xf32> to vector<32x128xf32>
    %51 = vector.shape_cast %14 : vector<32x128xf32> to vector<1x32x128xf32>
    tpu.vector_store %arg5[%c0_19, %c0_20, %c0_21], %51 {strides = array<i32>} : memref<1x32x128xf32, #tpu.memory_space<vmem>>, vector<1x32x128xf32>,
    return
  }
  func.func @transform_0(%arg0: i32, %arg1: i32) -> (i32, i32, i32) {
    %c0_i32 = arith.constant 0 : i32
    %c0_i32_0 = arith.constant 0 : i32
    return %arg0, %arg1, %c0_i32 : i32, i32, i32
  }
  func.func @transform_1(%arg0: i32, %arg1: i32) -> (i32, i32, i32) {
    %c1_i32 = arith.constant 1 : i32
    %0 = arith.addi %arg1, %c1_i32 : i32
    %c2_i32 = arith.constant 2 : i32
    %1 = arith.muli %0, %c2_i32 : i32
    %c0_i32 = arith.constant 0 : i32
    %c0_i32_0 = arith.constant 0 : i32
    return %arg0, %1, %c0_i32 : i32, i32, i32
  }
  func.func @transform_2(%arg0: i32, %arg1: i32) -> (i32, i32, i32) {
    %c0_i32 = arith.constant 0 : i32
    %c0_i32_0 = arith.constant 0 : i32
    %c0_i32_1 = arith.constant 0 : i32
    %c0_i32_2 = arith.constant 0 : i32
    return %c0_i32, %c0_i32_0, %c0_i32_1 : i32, i32, i32
  }
  func.func @transform_3(%arg0: i32, %arg1: i32) -> (i32, i32, i32) {
    %c0_i32 = arith.constant 0 : i32
    %c0_i32_0 = arith.constant 0 : i32
    return %arg0, %arg1, %c0_i32 : i32, i32, i32
  }
  func.func @transform_4(%arg0: i32, %arg1: i32) -> (i32, i32, i32) {
    %c0_i32 = arith.constant 0 : i32
    %c0_i32_0 = arith.constant 0 : i32
    return %arg0, %arg1, %c0_i32 : i32, i32, i32
  }
}

</mosaic_0001>

<llo_original>
// kernel: tpu_custom_call.1
$region0: #{tpu_custom_call.1}
  #allocation0 [shape = 'u32[]', space=smem, size = 0x4, offset = 0x4, fixed_abs, tag = 'smem constant byte address 0x4 - core index']
  #allocation1 [shape = 'u32[144,128]{1,0:T(1,128)}', space=vmem, size = 0x12000, scoped, tag = 'internal scratch']
  %s0 = inlined_call_operand.vmem [shape: f32[2,48,2], index: 0, kind: input, shape index: {}]
  %s1 = inlined_call_operand.vmem [shape: f32[2,48,2], index: 1, kind: input, shape index: {}]
  %s2 = inlined_call_operand.vmem [shape: f32[2,2,128], index: 2, kind: input, shape index: {}]
  %s3 = inlined_call_operand.hbm [shape: f32[2,64,128], index: 3, kind: output, shape index: {0}]
  %s4 = inlined_call_operand.hbm [shape: f32[2,8,128], index: 4, kind: output, shape index: {1}]
  %5 = xla_tuple %s3, %s4
  %s6 = sld [smem:[#allocation0]]
  $region53: #{tpu_custom_call.1} parent=0
    _
  %s8 = ssub.s32 1, %s6
  %s9 = scalar_select 0, %s8, %s6
  $region1: #{tpu_custom_call.1} parent=0
    #allocation2 [shape = 'u8[32768]{0}', space=vmem, size = 0x8000, scoped, tag = 'output window, operand 0']
    #allocation3 [shape = 's32[2]{0}', space=sflag, size = 0x8, scoped, tag = 'scoped memory for tpu_custom_call.1']
    #allocation4 [shape = 'u8[8192]{0}', space=vmem, size = 0x2000, scoped, tag = 'output window, operand 1']
    #allocation5 [shape = 's32[2]{0}', space=sflag, size = 0x8, scoped, tag = 'scoped memory for tpu_custom_call.1']
    %10 = vsyncpa [#allocation3], 0
    %s11 = scalar_lea.sflag [#allocation3], 1
    %12 = vsyncpa %s11, 0
    %13 = vsyncpa [#allocation5], 0
    %s14 = scalar_lea.sflag [#allocation5], 1
    %15 = vsyncpa %s14, 0
    loop: start=0, step=1, limit=4
    $region2: #{tpu_custom_call.1} parent=1 // loop_pre_header
      _
    $region3: #{tpu_custom_call.1} parent=1 // loop_header
      %s17 = sphi 0, %s21
      %p18 = scmp.ge.s32.totalorder %s17, 4
      %s24 = sphi 0, %s36
      %s25 = sphi 0, %s32
      %s26 = sphi 0, %s24
      %s27 = sphi 0, %s25
      %s28 = sphi 0, %s26
      %s29 = sphi 0, %s27
      %s41 = sphi 0, %s43
      %s44 = sphi 0, %s41
      %s45 = sphi 0, %s44
      %s61 = sphi 0, %s45
      %s73 = sphi 0, %s75
      %s76 = sphi 0, %s73
      %s77 = sphi 0, %s76
      %s93 = sphi 0, %s77
      %s97 = sphi 0, %s97
      %s99 = sphi 0, %s97
      %s100 = sphi 0, %s99
      %s114 = sphi 0, %s100
      %s122 = sphi 0, %s124
      %s125 = sphi 0, %s122
      %s126 = sphi 0, %s125
      %s142 = sphi 0, %s126
      %s150 = sphi 0, %s152
      %s153 = sphi 0, %s150
      %s154 = sphi 0, %s153
      %s170 = sphi 0, %s154
    $region4: #{tpu_custom_call.1} parent=1 // loop_header_branch
      %20 = sbr.rel (%p18) target = $region8
    $region5: #{tpu_custom_call.1} parent=1 // loop_body
      %s22 = ssub.s32 %s17, 1
      %s23 = ssub.s32 %s17, 2
      %s30 = sadd.s32 1, %s25
      %p31 = scmp.ge.s32.totalorder %s30, 1
      %s32 = scalar_select %p31, 0, %s30
      %s33 = sadd.s32 1, %s24
      %s34 = scalar_select %p31, %s33, %s24
      %p35 = scmp.ge.s32.totalorder %s34, 2
      %s36 = scalar_select %p35, 0, %s34
      %s37 = ssub.s32 %s24, %s36
      %s38 = ssub.s32 %s25, %s32
      %s39 = sor.u32 %s37, %s38
      %p40 = scmp.eq.s32.totalorder %s39, 0
      %s42 = sadd.s32 %s41, 1
      %s43 = scalar_select %p40, %s41, %s42
      %p46 = pneg %p40
      %p47 = scmp.eq.s32.totalorder %s17, 1
      %p48 = por %p46, %p47
      %p49 = scmp.ne.s32.totalorder %s41, %s44
      %p50 = scmp.eq.s32.totalorder %s17, 0
      %p51 = por %p49, %p50
      %p52 = scmp.ne.s32.totalorder %s41, %s44
      %p53 = scmp.eq.s32.totalorder %s22, 1
      %p54 = por %p52, %p53
      %p55 = scmp.ne.s32.totalorder %s44, %s45
      %p56 = scmp.eq.s32.totalorder %s22, 0
      %p57 = por %p55, %p56
      %p58 = scmp.ne.s32.totalorder %s44, %s45
      %p59 = scmp.eq.s32.totalorder %s23, 1
      %p60 = por %p58, %p59
      %p62 = scmp.ne.s32.totalorder %s45, %s61
      %p63 = scmp.eq.s32.totalorder %s23, 0
      %p64 = por %p62, %p63
      %s65 = sadd.s32 %s25, 1
      %s66 = smul.u32 %s65, 2
      %s67 = sadd.s32 %s32, 1
      %s68 = smul.u32 %s67, 2
      %s69 = ssub.s32 %s24, %s36
      %s70 = ssub.s32 %s66, %s68
      %s71 = sor.u32 %s69, %s70
      %p72 = scmp.eq.s32.totalorder %s71, 0
      %s74 = sadd.s32 %s73, 1
      %s75 = scalar_select %p72, %s73, %s74
      %p78 = pneg %p72
      %p79 = scmp.eq.s32.totalorder %s17, 1
      %p80 = por %p78, %p79
      %p81 = scmp.ne.s32.totalorder %s73, %s76
      %p82 = scmp.eq.s32.totalorder %s17, 0
      %p83 = por %p81, %p82
      %p84 = scmp.ne.s32.totalorder %s73, %s76
      %p85 = scmp.eq.s32.totalorder %s22, 1
      %p86 = por %p84, %p85
      %p87 = scmp.ne.s32.totalorder %s76, %s77
      %p88 = scmp.eq.s32.totalorder %s22, 0
      %p89 = por %p87, %p88
      %p90 = scmp.ne.s32.totalorder %s76, %s77
      %p91 = scmp.eq.s32.totalorder %s23, 1
      %p92 = por %p90, %p91
      %p94 = scmp.ne.s32.totalorder %s77, %s93
      %p95 = scmp.eq.s32.totalorder %s23, 0
      %p96 = por %p94, %p95
      %s98 = sadd.s32 %s97, 1
      %p101 = scmp.eq.s32.totalorder %s17, 1
      %p102 = scmp.ne.s32.totalorder %s97, %s99
      %p103 = scmp.eq.s32.totalorder %s17, 0
      %p104 = por %p102, %p103
      %p105 = scmp.ne.s32.totalorder %s97, %s99
      %p106 = scmp.eq.s32.totalorder %s22, 1
      %p107 = por %p105, %p106
      %p108 = scmp.ne.s32.totalorder %s99, %s100
      %p109 = scmp.eq.s32.totalorder %s22, 0
      %p110 = por %p108, %p109
      %p111 = scmp.ne.s32.totalorder %s99, %s100
      %p112 = scmp.eq.s32.totalorder %s23, 1
      %p113 = por %p111, %p112
      %p115 = scmp.ne.s32.totalorder %s100, %s114
      %p116 = scmp.eq.s32.totalorder %s23, 0
      %p117 = por %p115, %p116
      %s118 = ssub.s32 %s24, %s36
      %s119 = ssub.s32 %s25, %s32
      %s120 = sor.u32 %s118, %s119
      %p121 = scmp.eq.s32.totalorder %s120, 0
      %s123 = sadd.s32 %s122, 1
      %s124 = scalar_select %p121, %s122, %s123
      %p127 = pneg %p121
      %p128 = scmp.eq.s32.totalorder %s17, 1
      %p129 = por %p127, %p128
      %p130 = scmp.ne.s32.totalorder %s122, %s125
      %p131 = scmp.eq.s32.totalorder %s17, 0
      %p132 = por %p130, %p131
      %p133 = scmp.ne.s32.totalorder %s122, %s125
      %p134 = scmp.eq.s32.totalorder %s22, 1
      %p135 = por %p133, %p134
      %p136 = scmp.ne.s32.totalorder %s125, %s126
      %p137 = scmp.eq.s32.totalorder %s22, 0
      %p138 = por %p136, %p137
      %p139 = scmp.ne.s32.totalorder %s125, %s126
      %p140 = scmp.eq.s32.totalorder %s23, 1
      %p141 = por %p139, %p140
      %p143 = scmp.ne.s32.totalorder %s126, %s142
      %p144 = scmp.eq.s32.totalorder %s23, 0
      %p145 = por %p143, %p144
      %s146 = ssub.s32 %s24, %s36
      %s147 = ssub.s32 %s25, %s32
      %s148 = sor.u32 %s146, %s147
      %p149 = scmp.eq.s32.totalorder %s148, 0
      %s151 = sadd.s32 %s150, 1
      %s152 = scalar_select %p149, %s150, %s151
      %p155 = pneg %p149
      %p156 = scmp.eq.s32.totalorder %s17, 1
      %p157 = por %p155, %p156
      %p158 = scmp.ne.s32.totalorder %s150, %s153
      %p159 = scmp.eq.s32.totalorder %s17, 0
      %p160 = por %p158, %p159
      %p161 = scmp.ne.s32.totalorder %s150, %s153
      %p162 = scmp.eq.s32.totalorder %s22, 1
      %p163 = por %p161, %p162
      %p164 = scmp.ne.s32.totalorder %s153, %s154
      %p165 = scmp.eq.s32.totalorder %s22, 0
      %p166 = por %p164, %p165
      %p167 = scmp.ne.s32.totalorder %s153, %s154
      %p168 = scmp.eq.s32.totalorder %s23, 1
      %p169 = por %p167, %p168
      %p171 = scmp.ne.s32.totalorder %s154, %s170
      %p172 = scmp.eq.s32.totalorder %s23, 0
      %p173 = por %p171, %p172
      %p174 = scmp.le.s32.totalorder 1, %s17
      %p175 = scmp.lt.s32.totalorder %s17, 3
      %p176 = pnand %p174, %p175
      %p177 = pneg %p176
      // Predicated region
      $region9: #{tpu_custom_call.1} parent=5 // pred_check
        _
      $region10: #{tpu_custom_call.1} parent=5 // pred_check_branch
        %179 = sbr.rel (%p176) target = $region12
      $region11: #{tpu_custom_call.1} parent=5 // pred_region
        %s180 = ssub.s32 %s17, 1
        // Predicated region
        $region13: #{tpu_custom_call.1} parent=11 // pred_check
          %p181 = pneg %p110
        $region14: #{tpu_custom_call.1} parent=11 // pred_check_branch
          %183 = sbr.rel (%p181) target = $region16
        $region15: #{tpu_custom_call.1} parent=11 // pred_region
          _
        $region16: #{tpu_custom_call.1} parent=11 // pred_fallthru
          _
      $region12: #{tpu_custom_call.1} parent=5 // pred_fallthru
        _
      %p184 = scmp.lt.s32.totalorder %s17, 2
      // Predicated region
      $region17: #{tpu_custom_call.1} parent=5 // pred_check
        %p185 = pneg %p184
      $region18: #{tpu_custom_call.1} parent=5 // pred_check_branch
        %187 = sbr.rel (%p185) target = $region20
      $region19: #{tpu_custom_call.1} parent=5 // pred_region
        // Predicated region
        $region21: #{tpu_custom_call.1} parent=19 // pred_check
          %p188 = pneg %p51
        $region22: #{tpu_custom_call.1} parent=19 // pred_check_branch
          %190 = sbr.rel (%p188) target = $region24
        $region23: #{tpu_custom_call.1} parent=19 // pred_region
          %s191 = smul.u32 4, %s25
          %s192 = ssub.s32 6, %s191
          %p193 = scmp.lt.s32.totalorder %s192, 4
          %s194 = scalar_select %p193, %s192, 4
          %s195 = smul.u32 128, %s194
          %p196 = scmp.lt.s32.totalorder %s24, 1
          %s197 = scalar_select %p196, %s24, 1
          %p198 = scmp.lt.s32.totalorder %s191, 5
          %s199 = scalar_select %p198, %s191, 5
          %s200 = smul.addr %s197, 6
          %s201 = sadd.s32 %s199, %s200
          %s202 = smul.addr %s201, 8
          %s203 = scalar_lea.vmem %s0, %s202
          %s204 = smul.u32 4, %s25
          %s205 = ssub.s32 6, %s204
          %p206 = scmp.lt.s32.totalorder %s205, 4
          %s207 = scalar_select %p206, %s205, 4
          %s208 = smul.u32 128, %s207
        $region24: #{tpu_custom_call.1} parent=19 // pred_fallthru
          _
        // Predicated region
        $region25: #{tpu_custom_call.1} parent=19 // pred_check
          %p209 = pneg %p83
        $region26: #{tpu_custom_call.1} parent=19 // pred_check_branch
          %211 = sbr.rel (%p209) target = $region28
        $region27: #{tpu_custom_call.1} parent=19 // pred_region
          %s212 = sadd.s32 %s25, 1
          %s213 = smul.u32 %s212, 2
          %s214 = smul.u32 2, %s213
          %p215 = scmp.lt.s32.totalorder %s24, 1
          %s216 = scalar_select %p215, %s24, 1
          %p217 = scmp.lt.s32.totalorder %s214, 5
          %s218 = scalar_select %p217, %s214, 5
          %s219 = smul.addr %s216, 6
          %s220 = sadd.s32 %s218, %s219
          %s221 = smul.addr %s220, 8
          %s222 = scalar_lea.vmem %s1, %s221
          %s223 = sadd.s32 %s25, 1
          %s224 = smul.u32 %s223, 2
          %s225 = smul.u32 2, %s224
        $region28: #{tpu_custom_call.1} parent=19 // pred_fallthru
          _
      $region20: #{tpu_custom_call.1} parent=5 // pred_fallthru
        _
      %p226 = scmp.le.s32.totalorder 1, %s17
      %p227 = scmp.lt.s32.totalorder %s17, 3
      %p228 = pnand %p226, %p227
      %p229 = pneg %p228
      // Predicated region
      $region29: #{tpu_custom_call.1} parent=5 // pred_check
        _
      $region30: #{tpu_custom_call.1} parent=5 // pred_check_branch
        %231 = sbr.rel (%p228) target = $region32
      $region31: #{tpu_custom_call.1} parent=5 // pred_region
        %s232 = ssub.s32 %s17, 1
        %s233 = smul.u32 4, %s27
        %s234 = ssub.s32 6, %s233
        %p235 = scmp.lt.s32.totalorder %s234, 4
        %s236 = scalar_select %p235, %s234, 4
        %s237 = smul.u32 128, %s236
        %p238 = scmp.lt.s32.totalorder %s26, 1
        %s239 = scalar_select %p238, %s26, 1
        %p240 = scmp.lt.s32.totalorder %s233, 5
        %s241 = scalar_select %p240, %s233, 5
        %s242 = smul.addr %s239, 6
        %s243 = sadd.s32 %s241, %s242
        %s244 = smul.addr %s243, 8
        %s245 = scalar_lea.vmem %s0, %s244
        %p246 = pneg %p57
        %p247 = pneg %p54
        %s248 = sadd.s32 %s27, 1
        %s249 = smul.u32 %s248, 2
        %s250 = smul.u32 2, %s249
        %p251 = scmp.lt.s32.totalorder %s26, 1
        %s252 = scalar_select %p251, %s26, 1
        %p253 = scmp.lt.s32.totalorder %s250, 5
        %s254 = scalar_select %p253, %s250, 5
        %s255 = smul.addr %s252, 6
        %s256 = sadd.s32 %s254, %s255
        %s257 = smul.addr %s256, 8
        %s258 = scalar_lea.vmem %s1, %s257
        %p259 = pneg %p89
        %p260 = pneg %p86
        %p261 = pneg %p110
        %p262 = pneg %p107
        %p263 = pneg %p138
        %p264 = pneg %p135
        %s265 = sand.u32 %s125, 1
        %s266 = scalar_lea.sflag [#allocation3], %s265
        %s267 = sand.u32 %s125, 1
        %s268 = smul.addr %s267, 32
        %s269 = scalar_lea.vmem [#allocation2], %s268
        %p270 = pneg %p166
        %p271 = pneg %p163
        %s272 = sand.u32 %s153, 1
        %s273 = scalar_lea.sflag [#allocation5], %s272
        %s274 = sand.u32 %s153, 1
        %s275 = smul.addr %s274, 8
        %s276 = scalar_lea.vmem [#allocation4], %s275
        %s277 = smul.u32 4, %s27
        %s278 = ssub.s32 6, %s277
        %p279 = scmp.lt.s32.totalorder %s278, 4
        %s280 = scalar_select %p279, %s278, 4
        %s281 = smul.u32 128, %s280
        %p282 = scmp.lt.s32.totalorder %s26, 1
        %s283 = scalar_select %p282, %s26, 1
        %p284 = scmp.lt.s32.totalorder %s277, 5
        %s285 = scalar_select %p284, %s277, 5
        %s286 = smul.addr %s283, 6
        %s287 = sadd.s32 %s285, %s286
        %s288 = smul.addr %s287, 8
        %s289 = scalar_lea.vmem %s0, %s288
        %s290 = smul.u32 4, %s27
        %s291 = ssub.s32 6, %s290
        %p292 = scmp.lt.s32.totalorder %s291, 4
        %s293 = scalar_select %p292, %s291, 4
        %s294 = smul.u32 128, %s293
        %s295 = sadd.s32 %s27, 1
        %s296 = smul.u32 %s295, 2
        %s297 = smul.u32 2, %s296
        %p298 = scmp.lt.s32.totalorder %s26, 1
        %s299 = scalar_select %p298, %s26, 1
        %p300 = scmp.lt.s32.totalorder %s297, 5
        %s301 = scalar_select %p300, %s297, 5
        %s302 = smul.addr %s299, 6
        %s303 = sadd.s32 %s301, %s302
        %s304 = smul.addr %s303, 8
        %s305 = scalar_lea.vmem %s1, %s304
        %s306 = sadd.s32 %s27, 1
        %s307 = smul.u32 %s306, 2
        %s308 = smul.u32 2, %s307
        %s309 = smul.u32 4, %s27
        %v310 = vld [vmem:[%s289] sm:$0xff]
        %v311 = vld [vmem:[%s289 + $0x8] sm:$0xff]
        %v312 = vld [vmem:[%s289 + $0x10] sm:$0xff]
        %v313 = vld [vmem:[%s289 + $0x18] sm:$0xff]
        %v314 = vld [vmem:[%s305] sm:$0xff]
        %v315 = vld [vmem:[%s2] sm:$0x3]
        %s316 = scalar_lea.vmem %s2, 2
        %v317 = vld [vmem:[%s316] sm:$0x3]
        %vm323 = vcmask 1046528
        %v324 = vrot.slane %v310, 1
        %v325 = vrot.slane %v311, 1
        %v326 = vsel %vm323, %v324, %v325
        %v327 = vrot.slane %v312, 1
        %v328 = vsel %vm323, %v325, %v327
        %v329 = vrot.slane %v313, 1
        %v330 = vsel %vm323, %v327, %v329
        %v331 = vrot.slane %v314, 1
        %v332 = vsel %vm323, %v329, %v331
        %vm333 = vcmask 7168
        %v334 = vsel %vm333, %v326, 0
        %v336 = vsel %vm333, %v328, 0
        %v338 = vsel %vm333, %v330, 0
        %v340 = vsel %vm333, %v332, 0
        %vm342 = vcmask 1040384
        %v344 = vsel %vm342, %v317, 0
        %346 = vmatprep.subr.mxu0 0.0
        %347 = vmatpush1.msra.mxu0 %v344
        %348 = vmatprep.subr.mxu0 0.0
        %349 = vmatpush1.msra.mxu0 0.0
        %350 = vmatprep.subr.mxu0 0.0
        %351 = vmatpush1.msra.mxu0 0.0
        %352 = vmatprep.subr.mxu0 0.0
        %353 = vmatpush1.msra.mxu0 0.0
        %354 = vmatprep.subr.mxu0 0.0
        %355 = vmatpush1.msra.mxu0 0.0
        %356 = vmatprep.subr.mxu0 0.0
        %357 = vmatpush1.msra.mxu0 0.0
        %358 = vmatprep.subr.mxu0 0.0
        %359 = vmatpush1.msra.mxu0 0.0
        %360 = vmatprep.subr.mxu0 0.0
        %361 = vmatpush1.msra.mxu0 0.0
        %362 = vmatprep.subr.mxu0 0.0
        %363 = vmatpush1.msra.mxu0 0.0
        %364 = vmatprep.subr.mxu0 0.0
        %365 = vmatpush1.msra.mxu0 0.0
        %366 = vmatprep.subr.mxu0 0.0
        %367 = vmatpush1.msra.mxu0 0.0
        %368 = vmatprep.subr.mxu0 0.0
        %369 = vmatpush1.msra.mxu0 0.0
        %370 = vmatprep.subr.mxu0 0.0
        %371 = vmatpush1.msra.mxu0 0.0
        %372 = vmatprep.subr.mxu0 0.0
        %373 = vmatpush1.msra.mxu0 0.0
        %374 = vmatprep.subr.mxu0 0.0
        %375 = vmatpush1.msra.mxu0 0.0
        %376 = vmatprep.subr.mxu0 0.0
        %377 = vmatpush1.msra.mxu0 0.0
        %378 = vmatprep.subr.mxu0 0.0
        %379 = vmatpush1.msra.mxu0 0.0
        %380 = vmatprep.subr.mxu0 0.0
        %381 = vmatpush1.msra.mxu0 0.0
        %382 = vmatprep.subr.mxu0 0.0
        %383 = vmatpush1.msra.mxu0 0.0
        %384 = vmatprep.subr.mxu0 0.0
        %385 = vmatpush1.msra.mxu0 0.0
        %386 = vmatprep.subr.mxu0 0.0
        %387 = vmatpush1.msra.mxu0 0.0
        %388 = vmatprep.subr.mxu0 0.0
        %389 = vmatpush1.msra.mxu0 0.0
        %390 = vmatprep.subr.mxu0 0.0
        %391 = vmatpush1.msra.mxu0 0.0
        %392 = vmatprep.subr.mxu0 0.0
        %393 = vmatpush1.msra.mxu0 0.0
        %394 = vmatprep.subr.mxu0 0.0
        %395 = vmatpush1.msra.mxu0 0.0
        %396 = vmatprep.subr.mxu0 0.0
        %397 = vmatpush1.msra.mxu0 0.0
        %398 = vmatprep.subr.mxu0 0.0
        %399 = vmatpush1.msra.mxu0 0.0
        %400 = vmatprep.subr.mxu0 0.0
        %401 = vmatpush1.msra.mxu0 0.0
        %402 = vmatprep.subr.mxu0 0.0
        %403 = vmatpush1.msra.mxu0 0.0
        %404 = vmatprep.subr.mxu0 0.0
        %405 = vmatpush1.msra.mxu0 0.0
        %406 = vmatprep.subr.mxu0 0.0
        %407 = vmatpush1.msra.mxu0 0.0
        %408 = vmatprep.subr.mxu0 0.0
        %409 = vmatpush1.msra.mxu0 0.0
        %410 = vmatprep.mubr.f32.mxu0 0.0
        %411 = vmatmul.mubr.f32.gmra.mrb[0].mxu0 %v334
        %v412 = vpop.f32.mrb[0].mxu0
        %v413 = vadd.f32 0.0, %v412
        %v414 = vpop.f32.mrb[0].mxu0
        %415 = vmatprep.mubr.f32.mxu0 0.0
        %416 = vmatmul.mubr.f32.gmra.mrb[0].mxu0 %v336
        %v417 = vpop.f32.mrb[0].mxu0
        %v418 = vadd.f32 0.0, %v417
        %v419 = vpop.f32.mrb[0].mxu0
        %420 = vmatprep.mubr.f32.mxu0 0.0
        %421 = vmatmul.mubr.f32.gmra.mrb[0].mxu0 %v338
        %v422 = vpop.f32.mrb[0].mxu0
        %v423 = vadd.f32 0.0, %v422
        %v424 = vpop.f32.mrb[0].mxu0
        %425 = vmatprep.mubr.f32.mxu0 0.0
        %426 = vmatmul.mubr.f32.gmra.mrb[0].mxu0 %v340
        %v427 = vpop.f32.mrb[0].mxu0
        %v428 = vadd.f32 0.0, %v427
        %v429 = vpop.f32.mrb[0].mxu0
        %430 = vdwg.mxu0
        %vm431 = vcmask 15360
        %v432 = vsel %vm431, %v310, 0
        %v434 = vsel %vm431, %v311, 0
        %v436 = vsel %vm431, %v312, 0
        %v438 = vsel %vm431, %v313, 0
        %vm440 = vcmask 1041408
        %v442 = vsel %vm440, %v315, 0
        %444 = vmatprep.subr.mxu0 0.0
        %445 = vmatpush1.msra.mxu0 %v442
        %446 = vmatprep.subr.mxu0 0.0
        %447 = vmatpush1.msra.mxu0 0.0
        %448 = vmatprep.subr.mxu0 0.0
        %449 = vmatpush1.msra.mxu0 0.0
        %450 = vmatprep.subr.mxu0 0.0
        %451 = vmatpush1.msra.mxu0 0.0
        %452 = vmatprep.subr.mxu0 0.0
        %453 = vmatpush1.msra.mxu0 0.0
        %454 = vmatprep.subr.mxu0 0.0
        %455 = vmatpush1.msra.mxu0 0.0
        %456 = vmatprep.subr.mxu0 0.0
        %457 = vmatpush1.msra.mxu0 0.0
        %458 = vmatprep.subr.mxu0 0.0
        %459 = vmatpush1.msra.mxu0 0.0
        %460 = vmatprep.subr.mxu0 0.0
        %461 = vmatpush1.msra.mxu0 0.0
        %462 = vmatprep.subr.mxu0 0.0
        %463 = vmatpush1.msra.mxu0 0.0
        %464 = vmatprep.subr.mxu0 0.0
        %465 = vmatpush1.msra.mxu0 0.0
        %466 = vmatprep.subr.mxu0 0.0
        %467 = vmatpush1.msra.mxu0 0.0
        %468 = vmatprep.subr.mxu0 0.0
        %469 = vmatpush1.msra.mxu0 0.0
        %470 = vmatprep.subr.mxu0 0.0
        %471 = vmatpush1.msra.mxu0 0.0
        %472 = vmatprep.subr.mxu0 0.0
        %473 = vmatpush1.msra.mxu0 0.0
        %474 = vmatprep.subr.mxu0 0.0
        %475 = vmatpush1.msra.mxu0 0.0
        %476 = vmatprep.subr.mxu0 0.0
        %477 = vmatpush1.msra.mxu0 0.0
        %478 = vmatprep.subr.mxu0 0.0
        %479 = vmatpush1.msra.mxu0 0.0
        %480 = vmatprep.subr.mxu0 0.0
        %481 = vmatpush1.msra.mxu0 0.0
        %482 = vmatprep.subr.mxu0 0.0
        %483 = vmatpush1.msra.mxu0 0.0
        %484 = vmatprep.subr.mxu0 0.0
        %485 = vmatpush1.msra.mxu0 0.0
        %486 = vmatprep.subr.mxu0 0.0
        %487 = vmatpush1.msra.mxu0 0.0
        %488 = vmatprep.subr.mxu0 0.0
        %489 = vmatpush1.msra.mxu0 0.0
        %490 = vmatprep.subr.mxu0 0.0
        %491 = vmatpush1.msra.mxu0 0.0
        %492 = vmatprep.subr.mxu0 0.0
        %493 = vmatpush1.msra.mxu0 0.0
        %494 = vmatprep.subr.mxu0 0.0
        %495 = vmatpush1.msra.mxu0 0.0
        %496 = vmatprep.subr.mxu0 0.0
        %497 = vmatpush1.msra.mxu0 0.0
        %498 = vmatprep.subr.mxu0 0.0
        %499 = vmatpush1.msra.mxu0 0.0
        %500 = vmatprep.subr.mxu0 0.0
        %501 = vmatpush1.msra.mxu0 0.0
        %502 = vmatprep.subr.mxu0 0.0
        %503 = vmatpush1.msra.mxu0 0.0
        %504 = vmatprep.subr.mxu0 0.0
        %505 = vmatpush1.msra.mxu0 0.0
        %506 = vmatprep.subr.mxu0 0.0
        %507 = vmatpush1.msra.mxu0 0.0
        %508 = vmatprep.mubr.f32.mxu0 0.0
        %509 = vmatmul.mubr.f32.gmra.mrb[0].mxu0 %v432
        %v510 = vpop.f32.mrb[0].mxu0
        %v511 = vadd.f32 %v413, %v510
        %v512 = vpop.f32.mrb[0].mxu0
        %513 = vmatprep.mubr.f32.mxu0 0.0
        %514 = vmatmul.mubr.f32.gmra.mrb[0].mxu0 %v434
        %v515 = vpop.f32.mrb[0].mxu0
        %v516 = vadd.f32 %v418, %v515
        %v517 = vpop.f32.mrb[0].mxu0
        %518 = vmatprep.mubr.f32.mxu0 0.0
        %519 = vmatmul.mubr.f32.gmra.mrb[0].mxu0 %v436
        %v520 = vpop.f32.mrb[0].mxu0
        %v521 = vadd.f32 %v423, %v520
        %v522 = vpop.f32.mrb[0].mxu0
        %523 = vmatprep.mubr.f32.mxu0 0.0
        %524 = vmatmul.mubr.f32.gmra.mrb[0].mxu0 %v438
        %v525 = vpop.f32.mrb[0].mxu0
        %v526 = vadd.f32 %v428, %v525
        %v527 = vpop.f32.mrb[0].mxu0
        %528 = vdwg.mxu0
        %v529 = vlaneseq
        %v530 = vshrl.u32 %v529, 7
        %v531 = vadd.s32 %v530, 8
        %v532 = vadd.s32 %v530, 16
        %v533 = vadd.s32 %v530, 24
        %s534 = smul.u32 %s27, 32
        %v535 = vstv %s534
        %v536 = vadd.s32 %v530, %v535
        %v537 = vadd.s32 %v531, %v535
        %v538 = vadd.s32 %v532, %v535
        %v539 = vadd.s32 %v533, %v535
        %vm540 = vcmp.lt.s32.totalorder %v536, 31
        %vm541 = vcmp.lt.s32.totalorder %v537, 31
        %vm542 = vcmp.lt.s32.totalorder %v538, 31
        %vm543 = vcmp.lt.s32.totalorder %v539, 31
        %v544 = vsel %vm540, 1, 0
        %v545 = vsel %vm541, 1, 0
        %v546 = vsel %vm542, 1, 0
        %v547 = vsel %vm543, 1, 0
        %vm548 = vcmp.eq.s32.totalorder %v544, 1
        %vm549 = vcmp.eq.s32.totalorder %v545, 1
        %vm550 = vcmp.eq.s32.totalorder %v546, 1
        %vm551 = vcmp.eq.s32.totalorder %v547, 1
        %v552 = vsel %vm548, %v511, 0.0
        %v553 = vsel %vm549, %v516, 0.0
        %v554 = vsel %vm550, %v521, 0.0
        %v555 = vsel %vm551, %v526, 0.0
        %v556 = vadd.f32 %v552, %v553
        %v557 = vadd.f32 %v556, %v554
        %v558 = vadd.f32 %v557, %v555
        %v559 = vrot.slane %v558, 4
        %v560 = vadd.f32 %v558, %v559
        %v561 = vrot.slane %v560, 2
        %v562 = vadd.f32 %v560, %v561
        %v563 = vrot.slane %v562, 1
        %v564 = vadd.f32 %v562, %v563
        %v565 = vmul.f32 %v511, %v511
        %v566 = vmul.f32 %v516, %v516
        %v567 = vmul.f32 %v521, %v521
        %v568 = vmul.f32 %v526, %v526
        %v569 = vsel %vm548, %v565, 0.0
        %v570 = vsel %vm549, %v566, 0.0
        %v571 = vsel %vm550, %v567, 0.0
        %v572 = vsel %vm551, %v568, 0.0
        %v573 = vadd.f32 %v569, %v570
        %v574 = vadd.f32 %v573, %v571
        %v575 = vadd.f32 %v574, %v572
        %v576 = vrot.slane %v575, 4
        %v577 = vadd.f32 %v575, %v576
        %v578 = vrot.slane %v577, 2
        %v579 = vadd.f32 %v577, %v578
        %v580 = vrot.slane %v579, 1
        %v581 = vadd.f32 %v579, %v580
        %vm582 = vcmp.eq.s32.totalorder %v530, 0
        %vm583 = vcmp.eq.s32.totalorder %v530, 1
        %v584 = vsel %vm583, %v581, 0.0
        %v585 = vsel %vm582, %v564, %v584
        %586 = vst [vmem:[%s276] sm:$0xff] %v585
        %587 = vst [vmem:[%s269] sm:$0xff] %v511
        %588 = vst [vmem:[%s269 + $0x8] sm:$0xff] %v516
        %589 = vst [vmem:[%s269 + $0x10] sm:$0xff] %v521
        %590 = vst [vmem:[%s269 + $0x18] sm:$0xff] %v526
        %s591 = sand.u32 %s125, 1
        %s592 = scalar_lea.sflag [#allocation3], %s591
        %s593 = sand.u32 %s125, 1
        %s594 = smul.addr %s593, 32
        %s595 = scalar_lea.vmem [#allocation2], %s594
        %s596 = sand.u32 %s153, 1
        %s597 = scalar_lea.sflag [#allocation5], %s596
        %s598 = sand.u32 %s153, 1
        %s599 = smul.addr %s598, 8
        %s600 = scalar_lea.vmem [#allocation4], %s599
        // Predicated region
        $region33: #{tpu_custom_call.1} parent=31 // pred_check
          %p601 = pneg %p135
        $region34: #{tpu_custom_call.1} parent=31 // pred_check_branch
          %603 = sbr.rel (%p601) target = $region36
        $region35: #{tpu_custom_call.1} parent=31 // pred_region
          %s604 = smul.u32 4, %s27
          %s606 = ssub.s32 512, 512
          %607 = vsyncadd %s592, %s606
          %s608 = smul.addr %s26, 8
          %s609 = sadd.s32 %s604, %s608
          %s610 = smul.addr %s609, 128
          %s611 = scalar_lea.hbm %s3, %s610
          %s612 = sshll.u32 %s595, 4
          %s613 = int_to_ptr.vmem [resolvable:$true] %s612
          %618 = dma.vmem_to_hbm [thread:$0]  %s613, 512, %s611, %s592, 128, 128, 8
        $region36: #{tpu_custom_call.1} parent=31 // pred_fallthru
          _
        // Predicated region
        $region37: #{tpu_custom_call.1} parent=31 // pred_check
          %p619 = pneg %p163
        $region38: #{tpu_custom_call.1} parent=31 // pred_check_branch
          %621 = sbr.rel (%p619) target = $region40
        $region39: #{tpu_custom_call.1} parent=31 // pred_region
          %s623 = ssub.s32 128, 128
          %624 = vsyncadd %s597, %s623
          %s625 = sadd.s32 %s27, %s26
          %s626 = smul.addr %s625, 128
          %s627 = scalar_lea.hbm %s4, %s626
          %s629 = sshll.u32 %s600, 4
          %s630 = int_to_ptr.vmem [resolvable:$true] %s629
          %632 = dma.vmem_to_hbm [thread:$0]  %s630, 128, %s627, %s597
        $region40: #{tpu_custom_call.1} parent=31 // pred_fallthru
          _
      $region32: #{tpu_custom_call.1} parent=5 // pred_fallthru
        _
      %p633 = scmp.le.s32.totalorder 2, %s17
      // Predicated region
      $region41: #{tpu_custom_call.1} parent=5 // pred_check
        %p634 = pneg %p633
      $region42: #{tpu_custom_call.1} parent=5 // pred_check_branch
        %636 = sbr.rel (%p634) target = $region44
      $region43: #{tpu_custom_call.1} parent=5 // pred_region
        %s637 = ssub.s32 %s17, 2
        // Predicated region
        $region45: #{tpu_custom_call.1} parent=43 // pred_check
          %p638 = pneg %p141
        $region46: #{tpu_custom_call.1} parent=43 // pred_check_branch
          %640 = sbr.rel (%p638) target = $region48
        $region47: #{tpu_custom_call.1} parent=43 // pred_region
          %s641 = sand.u32 %s126, 1
          %s642 = scalar_lea.sflag [#allocation3], %s641
          %s643 = sand.u32 %s126, 1
          %s644 = smul.addr %s643, 32
          %s645 = scalar_lea.vmem [#allocation2], %s644
          %646 = dma.done %s642, 512
        $region48: #{tpu_custom_call.1} parent=43 // pred_fallthru
          _
        // Predicated region
        $region49: #{tpu_custom_call.1} parent=43 // pred_check
          %p647 = pneg %p169
        $region50: #{tpu_custom_call.1} parent=43 // pred_check_branch
          %649 = sbr.rel (%p647) target = $region52
        $region51: #{tpu_custom_call.1} parent=43 // pred_region
          %s650 = sand.u32 %s154, 1
          %s651 = scalar_lea.sflag [#allocation5], %s650
          %s652 = sand.u32 %s154, 1
          %s653 = smul.addr %s652, 8
          %s654 = scalar_lea.vmem [#allocation4], %s653
          %655 = dma.done %s651, 128
        $region52: #{tpu_custom_call.1} parent=43 // pred_fallthru
          _
      $region44: #{tpu_custom_call.1} parent=5 // pred_fallthru
        _
    $region6: #{tpu_custom_call.1} parent=1 // loop_footer
      %s21 = sadd.s32 1, %s17
    $region7: #{tpu_custom_call.1} parent=1 // loop_footer_branch
      %16 = sbr.rel target = $region3
    $region8: #{tpu_custom_call.1} parent=1 // loop_exit
      _
    %656 = vsyncpa [#allocation3], 1
    %s657 = scalar_lea.sflag [#allocation3], 1
    %658 = vsyncpa %s657, 1
    %659 = vsyncpa [#allocation5], 1
    %s660 = scalar_lea.sflag [#allocation5], 1
    %661 = vsyncpa %s660, 1

</llo_original>
